<compile_context>
chip_gen: v6e
topology: v6e:2x2x1
jax: 0.10.0
libtpu: 0.0.40
codegen_flags: <defaults>
</compile_context>

<pallas_src>
import jax
import jax.numpy as jnp
import numpy as np
from jax.experimental import pallas as pl
from jax.experimental.pallas import tpu as pltpu

_LANE = 128
_MAX_N_TILE = 512  # good compromise: ~roofline on v5e/v6e, fits v7x's 64 MiB VMEM


def _hilbert_matrix_stacked(n: int) -> np.ndarray:
    """[Re(M); Im(M)] with M = IFFT @ diag(2*heaviside(f, 0.5)) @ FFT, shape (2n, n)."""
    k = np.arange(n)
    # frequency vector exactly as in the torch module
    f = np.concatenate(
        [np.arange(0, (n - 1) // 2 + 1, dtype=np.float64) / n,
         np.arange(-(n // 2), 0, dtype=np.float64) / n])
    u = np.where(f > 0, 1.0, np.where(f == 0, 0.5, 0.0))   # heaviside(f, 0.5)
    F = np.exp(-2j * np.pi * np.outer(k, k) / n)            # forward DFT
    Finv = np.exp(2j * np.pi * np.outer(k, k) / n) / n      # inverse DFT
    M = Finv @ np.diag(2.0 * u) @ F
    return np.concatenate([M.real, M.imag], axis=0).astype(np.float32)


def hilbert_transform(x: jax.Array) -> jax.Array:
    """Analytic signal of real x [B, C, H, W] along axis=2. Returns complex64."""
    x = x.astype(jnp.float32)
    B, C, H, W = x.shape
    m = jnp.asarray(_hilbert_matrix_stacked(H))            # (2H, H) f32

    # Lane-dense layout: contract along H, put N = B*C*W on the lane axis.
    N = B * C * W
    x2 = jnp.transpose(x, (2, 0, 1, 3)).reshape(H, N)      # (H, N)

    n_tile = min(_MAX_N_TILE, ((N + _LANE - 1) // _LANE) * _LANE)
    n_pad = ((N + n_tile - 1) // n_tile) * n_tile
    if n_pad != N:
        x2 = jnp.pad(x2, ((0, 0), (0, n_pad - N)))

    def kernel(m_ref, x_ref, or_ref, oi_ref):
        # Single MXU pass for both real and imag parts.
        y = jnp.dot(m_ref[...], x_ref[...], preferred_element_type=jnp.float32)
        or_ref[...] = y[:H, :]
        oi_ref[...] = y[H:, :]

    # VMEM budget: double-buffered M + x block + two output blocks (+margin).
    block_bytes = 4 * (2 * (2 * H * H) + 2 * (H * n_tile) + 2 * 2 * (H * n_tile))
    vmem_limit = int(min(max(2 * block_bytes + (2 << 20), 32 << 20), 64 << 20))

    grid_spec = pltpu.PrefetchScalarGridSpec(
        num_scalar_prefetch=0,
        grid=(n_pad // n_tile,),
        in_specs=[
            # Constant LHS: index_map never changes, so it is fetched once.
            pl.BlockSpec((2 * H, H), lambda j: (0, 0)),
            pl.BlockSpec((H, n_tile), lambda j: (0, j)),
        ],
        out_specs=[
            pl.BlockSpec((H, n_tile), lambda j: (0, j)),
            pl.BlockSpec((H, n_tile), lambda j: (0, j)),
        ],
    )

    real, imag = pl.pallas_call(
        kernel,
        out_shape=(
            jax.ShapeDtypeStruct((H, n_pad), jnp.float32),
            jax.ShapeDtypeStruct((H, n_pad), jnp.float32),
        ),
        grid_spec=grid_spec,
        compiler_params=pltpu.CompilerParams(
            dimension_semantics=("parallel",),
            vmem_limit_bytes=vmem_limit,
        ),
    )(m, x2)

    # Back to NCHW; build complex64 directly (no intermediate complex temps).
    real = jnp.transpose(real[:, :N].reshape(H, B, C, W), (1, 2, 0, 3))
    imag = jnp.transpose(imag[:, :N].reshape(H, B, C, W), (1, 2, 0, 3))
    return jax.lax.complex(real, imag)


if __name__ == "__main__":
    key = jax.random.PRNGKey(0)
    B, C, H, W = 2, 4, 16, 16
    x = jax.random.normal(key, (B, C, H, W), dtype=jnp.float32)

    ht = jax.block_until_ready(hilbert_transform(x))

    # Reference: same math via jnp.fft (matches the torch module semantics).
    n = H
    f = np.concatenate(
        [np.arange(0, (n - 1) // 2 + 1) / n, np.arange(-(n // 2), 0) / n])
    u = np.where(f > 0, 1.0, np.where(f == 0, 0.5, 0.0)).astype(np.complex64)
    xf = jnp.fft.fft(x.astype(jnp.complex64), n=n, axis=2)
    ref = jnp.fft.ifft(xf * (2.0 * u)[None, None, :, None], axis=2)

    np.testing.assert_allclose(np.asarray(ht), np.asarray(ref),
                               rtol=1e-4, atol=1e-4)
    print("KERNEL_OK")
</pallas_src>

<mosaic_0001>
module attributes {stable_mosaic.version = 11 : i64} {
  func.func @kernel(%arg0: i32, %arg1: memref<32x16xf32, #tpu.memory_space<vmem>>, %arg2: memref<16x128xf32, #tpu.memory_space<vmem>>, %arg3: memref<16x128xf32, #tpu.memory_space<vmem>>, %arg4: memref<16x128xf32, #tpu.memory_space<vmem>>) attributes {dimension_semantics = [#tpu.dimension_semantics<parallel>], iteration_bounds = array<i64: 1>, scalar_prefetch = 0 : i64, scratch_operands = 0 : i64, tpu.core_type = #tpu.core_type<tc>, window_params = [{pipeline_mode = #tpu.pipeline_mode<synchronous>, transform_indices = @transform_0, window_bounds = array<i64: 32, 16>}, {transform_indices = @transform_1, window_bounds = array<i64: 16, 128>}, {transform_indices = @transform_2, window_bounds = array<i64: 16, 128>}, {transform_indices = @transform_3, window_bounds = array<i64: 16, 128>}]} {
    %c0 = arith.constant 0 : index
    %c0_0 = arith.constant 0 : index
    %0 = vector.load %arg1[%c0, %c0_0] : memref<32x16xf32, #tpu.memory_space<vmem>>, vector<32x16xf32>
    %c0_1 = arith.constant 0 : index
    %c0_2 = arith.constant 0 : index
    %1 = vector.load %arg2[%c0_1, %c0_2] : memref<16x128xf32, #tpu.memory_space<vmem>>, vector<16x128xf32>
    %cst = arith.constant dense<0.000000e+00> : vector<32x128xf32>
    %2 = tpu.matmul %0, %1, %cst {dimension_numbers = #tpu.dot_dimension_numbers<[1], [0], [0], [1], [0, 0, 1, 1], [], []>} : vector<32x16xf32>, vector<16x128xf32>, vector<32x128xf32> -> vector<32x128xf32>
    %3 = vector.extract_strided_slice %2 {offsets = [0, 0], sizes = [16, 128], strides = [1, 1]} : vector<32x128xf32> to vector<16x128xf32>
    %c0_3 = arith.constant 0 : index
    %c0_4 = arith.constant 0 : index
    %4 = vector.load %arg3[%c0_3, %c0_4] : memref<16x128xf32, #tpu.memory_space<vmem>>, vector<16x128xf32>
    tpu.vector_store %arg3[%c0_3, %c0_4], %3 {strides = array<i32>} : memref<16x128xf32, #tpu.memory_space<vmem>>, vector<16x128xf32>,
    %5 = vector.extract_strided_slice %2 {offsets = [16, 0], sizes = [16, 128], strides = [1, 1]} : vector<32x128xf32> to vector<16x128xf32>
    %c0_5 = arith.constant 0 : index
    %c0_6 = arith.constant 0 : index
    %6 = vector.load %arg4[%c0_5, %c0_6] : memref<16x128xf32, #tpu.memory_space<vmem>>, vector<16x128xf32>
    tpu.vector_store %arg4[%c0_5, %c0_6], %5 {strides = array<i32>} : memref<16x128xf32, #tpu.memory_space<vmem>>, vector<16x128xf32>,
    return
  }
  func.func @transform_0(%arg0: i32) -> (i32, i32) {
    %c0_i32 = arith.constant 0 : i32
    %c0_i32_0 = arith.constant 0 : i32
    %c0_i32_1 = arith.constant 0 : i32
    return %c0_i32, %c0_i32_0 : i32, i32
  }
  func.func @transform_1(%arg0: i32) -> (i32, i32) {
    %c0_i32 = arith.constant 0 : i32
    %c0_i32_0 = arith.constant 0 : i32
    return %c0_i32, %arg0 : i32, i32
  }
  func.func @transform_2(%arg0: i32) -> (i32, i32) {
    %c0_i32 = arith.constant 0 : i32
    %c0_i32_0 = arith.constant 0 : i32
    return %c0_i32, %arg0 : i32, i32
  }
  func.func @transform_3(%arg0: i32) -> (i32, i32) {
    %c0_i32 = arith.constant 0 : i32
    %c0_i32_0 = arith.constant 0 : i32
    return %c0_i32, %arg0 : i32, i32
  }
}

</mosaic_0001>

<llo_original>
// kernel: tpu_custom_call.1
$region0: #{tpu_custom_call.1}
  #allocation0 [shape = 'u32[]', space=smem, size = 0x4, offset = 0x4, fixed_abs, tag = 'smem constant byte address 0x4 - core index']
  #allocation1 [shape = 'u32[144,128]{1,0:T(1,128)}', space=vmem, size = 0x12000, scoped, tag = 'internal scratch']
  %s0 = inlined_call_operand.vmem [shape: f32[32,16], index: 0, kind: input, shape index: {}]
  %s1 = inlined_call_operand.vmem [shape: f32[16,128], index: 1, kind: input, shape index: {}]
  %s2 = inlined_call_operand.hbm [shape: f32[16,128], index: 2, kind: output, shape index: {0}]
  %s3 = inlined_call_operand.hbm [shape: f32[16,128], index: 3, kind: output, shape index: {1}]
  %4 = xla_tuple %s2, %s3
  %s5 = sld [smem:[#allocation0]]
  $region26: #{tpu_custom_call.1} parent=0
    _
  %s7 = ssub.s32 1, %s5
  %s8 = scalar_select 0, %s7, %s5
  $region1: #{tpu_custom_call.1} parent=0
    #allocation2 [shape = 'u8[8192]{0}', space=vmem, size = 0x2000, scoped, tag = 'output window, operand 0, single buffered']
    #allocation3 [shape = 's32[1]{0}', space=sflag, size = 0x4, scoped, tag = 'scoped memory for tpu_custom_call.1']
    #allocation4 [shape = 'u8[8192]{0}', space=vmem, size = 0x2000, scoped, tag = 'output window, operand 1, single buffered']
    #allocation5 [shape = 's32[1]{0}', space=sflag, size = 0x4, scoped, tag = 'scoped memory for tpu_custom_call.1']
    %9 = vsyncpa [#allocation3], 0
    %10 = vsyncpa [#allocation5], 0
    // Predicated region
    $region2: #{tpu_custom_call.1} parent=1 // pred_check
      _
    $region3: #{tpu_custom_call.1} parent=1 // pred_check_branch
      %12 = sbr.rel (0) target = $region5
    $region4: #{tpu_custom_call.1} parent=1 // pred_region
      _
    $region5: #{tpu_custom_call.1} parent=1 // pred_fallthru
      _
    // Predicated region
    $region6: #{tpu_custom_call.1} parent=1 // pred_check
      _
    $region7: #{tpu_custom_call.1} parent=1 // pred_check_branch
      %14 = sbr.rel (0) target = $region9
    $region8: #{tpu_custom_call.1} parent=1 // pred_region
      _
    $region9: #{tpu_custom_call.1} parent=1 // pred_fallthru
      _
    %v15 = vld [vmem:[%s0] sm:$0xff]
    %v16 = vld [vmem:[%s0 + $0x8] sm:$0xff]
    %v17 = vld [vmem:[%s0 + $0x10] sm:$0xff]
    %v18 = vld [vmem:[%s0 + $0x18] sm:$0xff]
    %v19 = vld [vmem:[%s1] sm:$0xff]
    %v20 = vld [vmem:[%s1 + $0x8] sm:$0xff]
    %vm21 = vcmask 130048
    %v23 = vsel %vm21, %v15, 0
    %v26 = vsel %vm21, %v16, 0
    %v29 = vsel %vm21, %v17, 0
    %v32 = vsel %vm21, %v18, 0
    %34 = vmatprep.subr.mxu0 0.0
    %35 = vmatpush1.msra.mxu0 0.0
    %36 = vmatprep.subr.mxu0 0.0
    %37 = vmatpush1.msra.mxu0 0.0
    %38 = vmatprep.subr.mxu0 0.0
    %39 = vmatpush1.msra.mxu0 0.0
    %40 = vmatprep.subr.mxu0 0.0
    %41 = vmatpush1.msra.mxu0 0.0
    %42 = vmatprep.subr.mxu0 0.0
    %43 = vmatpush1.msra.mxu0 0.0
    %44 = vmatprep.subr.mxu0 0.0
    %45 = vmatpush1.msra.mxu0 0.0
    %46 = vmatprep.subr.mxu0 0.0
    %47 = vmatpush1.msra.mxu0 0.0
    %48 = vmatprep.subr.mxu0 0.0
    %49 = vmatpush1.msra.mxu0 0.0
    %50 = vmatprep.subr.mxu0 0.0
    %51 = vmatpush1.msra.mxu0 0.0
    %52 = vmatprep.subr.mxu0 0.0
    %53 = vmatpush1.msra.mxu0 0.0
    %54 = vmatprep.subr.mxu0 0.0
    %55 = vmatpush1.msra.mxu0 0.0
    %56 = vmatprep.subr.mxu0 0.0
    %57 = vmatpush1.msra.mxu0 0.0
    %58 = vmatprep.subr.mxu0 0.0
    %59 = vmatpush1.msra.mxu0 0.0
    %60 = vmatprep.subr.mxu0 0.0
    %61 = vmatpush1.msra.mxu0 0.0
    %62 = vmatprep.subr.mxu0 0.0
    %63 = vmatpush1.msra.mxu0 %v20
    %64 = vmatprep.subr.mxu0 0.0
    %65 = vmatpush1.msra.mxu0 %v19
    %66 = vmatprep.subr.mxu0 0.0
    %67 = vmatpush2.msra.mxu0 0.0
    %68 = vmatprep.subr.mxu0 0.0
    %69 = vmatpush2.msra.mxu0 0.0
    %70 = vmatprep.subr.mxu0 0.0
    %71 = vmatpush2.msra.mxu0 0.0
    %72 = vmatprep.subr.mxu0 0.0
    %73 = vmatpush2.msra.mxu0 0.0
    %74 = vmatprep.subr.mxu0 0.0
    %75 = vmatpush2.msra.mxu0 0.0
    %76 = vmatprep.subr.mxu0 0.0
    %77 = vmatpush2.msra.mxu0 0.0
    %78 = vmatprep.subr.mxu0 0.0
    %79 = vmatpush2.msra.mxu0 0.0
    %80 = vmatprep.subr.mxu0 0.0
    %81 = vmatpush2.msra.mxu0 0.0
    %82 = vmatprep.subr.mxu0 0.0
    %83 = vmatpush2.msra.mxu0 0.0
    %84 = vmatprep.subr.mxu0 0.0
    %85 = vmatpush2.msra.mxu0 0.0
    %86 = vmatprep.subr.mxu0 0.0
    %87 = vmatpush2.msra.mxu0 0.0
    %88 = vmatprep.subr.mxu0 0.0
    %89 = vmatpush2.msra.mxu0 0.0
    %90 = vmatprep.subr.mxu0 0.0
    %91 = vmatpush2.msra.mxu0 0.0
    %92 = vmatprep.subr.mxu0 0.0
    %93 = vmatpush2.msra.mxu0 0.0
    %94 = vmatprep.subr.mxu0 0.0
    %95 = vmatpush2.msra.mxu0 0.0
    %96 = vmatprep.subr.mxu0 0.0
    %97 = vmatpush2.msra.mxu0 0.0
    %98 = vmatprep.mubr.f32.mxu0 0.0
    %99 = vmatmul.mubr.f32.gmra.mxu0 %v23
    %v100 = vpop.f32.mrf.mxu0
    %v101 = vadd.f32 0.0, %v100
    %v102 = vpop.f32.mrf.mxu0
    %103 = vmatprep.mubr.f32.mxu0 0.0
    %104 = vmatmul.mubr.f32.gmra.mxu0 %v26
    %v105 = vpop.f32.mrf.mxu0
    %v106 = vadd.f32 0.0, %v105
    %v107 = vpop.f32.mrf.mxu0
    %108 = vmatprep.mubr.f32.mxu0 0.0
    %109 = vmatmul.mubr.f32.gmra.mxu0 %v29
    %v110 = vpop.f32.mrf.mxu0
    %v111 = vadd.f32 0.0, %v110
    %v112 = vpop.f32.mrf.mxu0
    %113 = vmatprep.mubr.f32.mxu0 0.0
    %114 = vmatmul.mubr.f32.gmra.mxu0 %v32
    %v115 = vpop.f32.mrf.mxu0
    %v116 = vadd.f32 0.0, %v115
    %v117 = vpop.f32.mrf.mxu0
    %118 = vdwg.mxu0
    %119 = vst [vmem:[#allocation2] sm:$0xff] %v101
    %120 = vst [vmem:[#allocation2 + $0x8] sm:$0xff] %v106
    %121 = vst [vmem:[#allocation4] sm:$0xff] %v111
    %122 = vst [vmem:[#allocation4 + $0x8] sm:$0xff] %v116
    // Predicated region
    $region10: #{tpu_custom_call.1} parent=1 // pred_check
      _
    $region11: #{tpu_custom_call.1} parent=1 // pred_check_branch
      %124 = sbr.rel (0) target = $region13
    $region12: #{tpu_custom_call.1} parent=1 // pred_region
      %s126 = ssub.s32 256, 256
      %127 = vsyncadd [#allocation3], %s126
      %s128 = sshll.u32 [#allocation2], 4
      %s129 = int_to_ptr.vmem [resolvable:$true] %s128
      %134 = dma.vmem_to_hbm [thread:$0]  %s129, 256, %s2, [#allocation3], 128, 128, 8
    $region13: #{tpu_custom_call.1} parent=1 // pred_fallthru
      _
    // Predicated region
    $region14: #{tpu_custom_call.1} parent=1 // pred_check
      _
    $region15: #{tpu_custom_call.1} parent=1 // pred_check_branch
      %136 = sbr.rel (0) target = $region17
    $region16: #{tpu_custom_call.1} parent=1 // pred_region
      %s138 = ssub.s32 256, 256
      %139 = vsyncadd [#allocation5], %s138
      %s140 = sshll.u32 [#allocation4], 4
      %s141 = int_to_ptr.vmem [resolvable:$true] %s140
      %146 = dma.vmem_to_hbm [thread:$0]  %s141, 256, %s3, [#allocation5], 128, 128, 8
    $region17: #{tpu_custom_call.1} parent=1 // pred_fallthru
      _
    // Predicated region
    $region18: #{tpu_custom_call.1} parent=1 // pred_check
      _
    $region19: #{tpu_custom_call.1} parent=1 // pred_check_branch
      %148 = sbr.rel (0) target = $region21
    $region20: #{tpu_custom_call.1} parent=1 // pred_region
      %149 = dma.done [#allocation3], 256
    $region21: #{tpu_custom_call.1} parent=1 // pred_fallthru
      _
    // Predicated region
    $region22: #{tpu_custom_call.1} parent=1 // pred_check
      _
    $region23: #{tpu_custom_call.1} parent=1 // pred_check_branch
      %151 = sbr.rel (0) target = $region25
    $region24: #{tpu_custom_call.1} parent=1 // pred_region
      %152 = dma.done [#allocation5], 256
    $region25: #{tpu_custom_call.1} parent=1 // pred_fallthru
      _
    %153 = vsyncpa [#allocation3], 1
    %154 = vsyncpa [#allocation5], 1

</llo_original>
